<compile_context>
chip_gen: v7x
topology: tpu7x:2x2x1
jax: 0.10.0
libtpu: 0.0.40
codegen_flags: <defaults>
</compile_context>

<pallas_src>
import jax
import jax.numpy as jnp
from jax.experimental import pallas as pl
from jax.experimental.pallas import tpu as pltpu


def _input_process_kernel(x_ref, w_ref, b_ref, o_ref):
    """One frame-tile of  out[f, b, :] = W @ x[b, :, f] + bias.

    x_ref: (bs, K, TILE_F)      input tile in native (batch, feat, frame) layout
    w_ref: (N_pad, K)           VMEM-resident weight, nn.Linear (out, in) layout
    b_ref: (1, N_pad)           VMEM-resident bias
    o_ref: (TILE_F, bs, N_pad)  frame-major output tile (lane-dense last dim)
    """
    w = w_ref[...]
    b = b_ref[...]
    for bi in range(x_ref.shape[0]):                      # static unroll over batch
        # Plain contraction (lhs dim 1 vs rhs dim 0): no operand transpose on MXU.
        y = jnp.dot(w, x_ref[bi], preferred_element_type=jnp.float32)  # (N_pad, TILE_F)
        # Transpose only the small result tile (XLU), add bias, store lane-dense.
        o_ref[:, bi, :] = (jnp.transpose(y) + b).astype(o_ref.dtype)


def _round_up(v, m):
    return ((v + m - 1) // m) * m


def _vmem_capacity_bytes():
    try:
        return int(pltpu.get_tpu_info().vmem_capacity_bytes)
    except Exception:
        return 64 * 1024 * 1024   # conservative default (v7x per-core VMEM)


def input_process_forward(x, weight, bias):
    """JAX/Pallas equivalent of InputProcess.forward for data_rep='genea_vec'.

    Args:
      x:      (bs, njoints, nfeats, nframes)
      weight: (latent_dim, input_feats)   -- nn.Linear convention (out, in)
      bias:   (latent_dim,)
    Returns:
      (nframes, bs, latent_dim), dtype of x.
    """
    bs, njoints, nfeats, nframes = x.shape
    K = njoints * nfeats                     # input_feats
    N = weight.shape[0]                      # latent_dim
    N_pad = _round_up(N, 128)                # lane-dense output channels

    # Free, contiguous reshape: (bs, njoints, nfeats, nframes) -> (bs, K, nframes).
    x3d = x.reshape(bs, K, nframes)

    # Zero-pad latent_dim so output stores are full-lane (unmasked) vst's.
    if N_pad != N:
        weight = jnp.pad(weight, ((0, N_pad - N), (0, 0)))
        bias = jnp.pad(bias, ((0, N_pad - N),))
    b2d = bias.reshape(1, N_pad)

    in_sz = jnp.dtype(x.dtype).itemsize
    w_sz = jnp.dtype(weight.dtype).itemsize
    out_sz = in_sz

    # ---- per-generation VMEM budget & frame-tile sizing -------------------
    vmem_cap = _vmem_capacity_bytes()        # 128 MiB on v5e/v6e, 64 MiB on v7x
    vmem_budget = int(vmem_cap * 0.85)

    resident = 2 * N_pad * K * w_sz + 2 * 8 * N_pad * w_sz      # dbl-buffered W + bias
    per_frame = 2 * bs * (K * in_sz + N_pad * out_sz)           # dbl-buffered x + out cols
    max_tf_fit = max(1, (vmem_budget - resident) // per_frame)  # frames that fit in VMEM

    if nframes <= max_tf_fit:
        if nframes >= 256:
            # >= 2 lane-aligned frame tiles so both v7x TensorCores get work.
            tile_f = _round_up(pl.cdiv(nframes, 2), 128)
        else:
            tile_f = nframes                 # single full-extent frame block
    else:
        tile_f = max(128, (max_tf_fit // 128) * 128)   # largest lane-aligned tile that fits

    grid = (pl.cdiv(nframes, tile_f),)

    # vmem limit from the actual footprint (never clamp below it), capped by capacity.
    need = 2 * bs * tile_f * (K * in_sz + N_pad * out_sz) + resident
    vmem_limit = min(max(need * 3 // 2, 32 * 1024 * 1024), int(vmem_cap * 0.92))
    vmem_limit = int(min(max(vmem_limit, need), vmem_cap))

    out_padded = pl.pallas_call(
        _input_process_kernel,
        out_shape=jax.ShapeDtypeStruct((nframes, bs, N_pad), x.dtype),
        grid_spec=pltpu.PrefetchScalarGridSpec(
            num_scalar_prefetch=0,
            grid=grid,
            in_specs=[
                pl.BlockSpec((bs, K, tile_f), lambda f: (0, 0, f)),  # x tile, native layout
                pl.BlockSpec((N_pad, K), lambda f: (0, 0)),          # weight resident in VMEM
                pl.BlockSpec((1, N_pad), lambda f: (0, 0)),          # bias resident in VMEM
            ],
            out_specs=pl.BlockSpec((tile_f, bs, N_pad), lambda f: (f, 0, 0)),
        ),
        compiler_params=pltpu.CompilerParams(
            dimension_semantics=("parallel",),   # frame tiles shard across v7x TensorCores
            vmem_limit_bytes=vmem_limit,
        ),
    )(x3d, weight, b2d)

    return out_padded if N_pad == N else out_padded[:, :, :N]


if __name__ == "__main__":
    # Small shapes consistent with the module.
    bs, njoints, nfeats, nframes = 2, 4, 16, 16
    input_feats = njoints * nfeats           # 64
    latent_dim = 32

    key = jax.random.PRNGKey(0)
    kx, kw, kb = jax.random.split(key, 3)

    # nn.Linear-style parameters: W (out, in), b (out,)
    bound = 1.0 / (input_feats ** 0.5)
    weight = jax.random.uniform(kw, (latent_dim, input_feats), jnp.float32,
                                minval=-bound, maxval=bound)
    bias = jax.random.uniform(kb, (latent_dim,), jnp.float32,
                              minval=-bound, maxval=bound)
    x = jax.random.normal(kx, (bs, njoints, nfeats, nframes), jnp.float32)

    out = jax.block_until_ready(input_process_forward(x, weight, bias))

    # Pure-JAX reference with identical semantics to the PyTorch module.
    x_perm = jnp.transpose(x, (3, 0, 1, 2)).reshape(nframes, bs, input_feats)
    ref = x_perm @ weight.T + bias
    assert out.shape == (nframes, bs, latent_dim), out.shape
    assert jnp.allclose(out, ref, atol=1e-5, rtol=1e-5), \
        float(jnp.max(jnp.abs(out - ref)))

    print("KERNEL_OK")
</pallas_src>

<mosaic_0001>
module attributes {stable_mosaic.version = 11 : i64} {
  func.func @_input_process_kernel(%arg0: i32, %arg1: memref<2x64x16xf32, #tpu.memory_space<vmem>>, %arg2: memref<128x64xf32, #tpu.memory_space<vmem>>, %arg3: memref<1x128xf32, #tpu.memory_space<vmem>>, %arg4: memref<16x2x128xf32, #tpu.memory_space<vmem>>) attributes {dimension_semantics = [#tpu.dimension_semantics<parallel>], iteration_bounds = array<i64: 1>, scalar_prefetch = 0 : i64, scratch_operands = 0 : i64, tpu.core_type = #tpu.core_type<tc>, window_params = [{transform_indices = @transform_0, window_bounds = array<i64: 2, 64, 16>}, {pipeline_mode = #tpu.pipeline_mode<synchronous>, transform_indices = @transform_1, window_bounds = array<i64: 128, 64>}, {pipeline_mode = #tpu.pipeline_mode<synchronous>, transform_indices = @transform_2, window_bounds = array<i64: 1, 128>}, {transform_indices = @transform_3, window_bounds = array<i64: 16, 2, 128>}]} {
    %c0 = arith.constant 0 : index
    %c0_0 = arith.constant 0 : index
    %0 = vector.load %arg2[%c0, %c0_0] : memref<128x64xf32, #tpu.memory_space<vmem>>, vector<128x64xf32>
    %c0_1 = arith.constant 0 : index
    %c0_2 = arith.constant 0 : index
    %1 = vector.load %arg3[%c0_1, %c0_2] : memref<1x128xf32, #tpu.memory_space<vmem>>, vector<1x128xf32>
    %c0_3 = arith.constant 0 : index
    %c0_4 = arith.constant 0 : index
    %c0_5 = arith.constant 0 : index
    %2 = vector.load %arg1[%c0_3, %c0_4, %c0_5] : memref<2x64x16xf32, #tpu.memory_space<vmem>>, vector<1x64x16xf32>
    %3 = vector.shape_cast %2 : vector<1x64x16xf32> to vector<64x16xf32>
    %cst = arith.constant dense<0.000000e+00> : vector<128x16xf32>
    %4 = tpu.matmul %0, %3, %cst {dimension_numbers = #tpu.dot_dimension_numbers<[1], [0], [0], [1], [0, 0, 1, 1], [], []>} : vector<128x64xf32>, vector<64x16xf32>, vector<128x16xf32> -> vector<128x16xf32>
    %5 = tpu.transpose %4, [1, 0] : vector<128x16xf32> -> vector<16x128xf32>
    %6 = vector.broadcast %1 : vector<1x128xf32> to vector<16x128xf32>
    %7 = arith.addf %5, %6 : vector<16x128xf32>
    %c0_6 = arith.constant 0 : index
    %c0_7 = arith.constant 0 : index
    %c0_8 = arith.constant 0 : index
    %8 = vector.load %arg4[%c0_6, %c0_7, %c0_8] : memref<16x2x128xf32, #tpu.memory_space<vmem>>, vector<16x1x128xf32>
    %9 = vector.shape_cast %8 : vector<16x1x128xf32> to vector<16x128xf32>
    %10 = vector.shape_cast %7 : vector<16x128xf32> to vector<16x1x128xf32>
    tpu.vector_store %arg4[%c0_6, %c0_7, %c0_8], %10 {strides = array<i32>} : memref<16x2x128xf32, #tpu.memory_space<vmem>>, vector<16x1x128xf32>,
    %c1 = arith.constant 1 : index
    %c0_9 = arith.constant 0 : index
    %c0_10 = arith.constant 0 : index
    %11 = vector.load %arg1[%c1, %c0_9, %c0_10] : memref<2x64x16xf32, #tpu.memory_space<vmem>>, vector<1x64x16xf32>
    %12 = vector.shape_cast %11 : vector<1x64x16xf32> to vector<64x16xf32>
    %cst_11 = arith.constant dense<0.000000e+00> : vector<128x16xf32>
    %13 = tpu.matmul %0, %12, %cst_11 {dimension_numbers = #tpu.dot_dimension_numbers<[1], [0], [0], [1], [0, 0, 1, 1], [], []>} : vector<128x64xf32>, vector<64x16xf32>, vector<128x16xf32> -> vector<128x16xf32>
    %14 = tpu.transpose %13, [1, 0] : vector<128x16xf32> -> vector<16x128xf32>
    %15 = vector.broadcast %1 : vector<1x128xf32> to vector<16x128xf32>
    %16 = arith.addf %14, %15 : vector<16x128xf32>
    %c0_12 = arith.constant 0 : index
    %c1_13 = arith.constant 1 : index
    %c0_14 = arith.constant 0 : index
    %17 = vector.load %arg4[%c0_12, %c1_13, %c0_14] : memref<16x2x128xf32, #tpu.memory_space<vmem>>, vector<16x1x128xf32>
    %18 = vector.shape_cast %17 : vector<16x1x128xf32> to vector<16x128xf32>
    %19 = vector.shape_cast %16 : vector<16x128xf32> to vector<16x1x128xf32>
    tpu.vector_store %arg4[%c0_12, %c1_13, %c0_14], %19 {strides = array<i32>} : memref<16x2x128xf32, #tpu.memory_space<vmem>>, vector<16x1x128xf32>,
    return
  }
  func.func @transform_0(%arg0: i32) -> (i32, i32, i32) {
    %c0_i32 = arith.constant 0 : i32
    %c0_i32_0 = arith.constant 0 : i32
    %c0_i32_1 = arith.constant 0 : i32
    return %c0_i32, %c0_i32_0, %arg0 : i32, i32, i32
  }
  func.func @transform_1(%arg0: i32) -> (i32, i32) {
    %c0_i32 = arith.constant 0 : i32
    %c0_i32_0 = arith.constant 0 : i32
    %c0_i32_1 = arith.constant 0 : i32
    return %c0_i32, %c0_i32_0 : i32, i32
  }
  func.func @transform_2(%arg0: i32) -> (i32, i32) {
    %c0_i32 = arith.constant 0 : i32
    %c0_i32_0 = arith.constant 0 : i32
    %c0_i32_1 = arith.constant 0 : i32
    return %c0_i32, %c0_i32_0 : i32, i32
  }
  func.func @transform_3(%arg0: i32) -> (i32, i32, i32) {
    %c0_i32 = arith.constant 0 : i32
    %c0_i32_0 = arith.constant 0 : i32
    %c0_i32_1 = arith.constant 0 : i32
    return %arg0, %c0_i32, %c0_i32_0 : i32, i32, i32
  }
}

</mosaic_0001>

<llo_original>
// kernel: tpu_custom_call.1
$region0: #{tpu_custom_call.1}
  #allocation0 [shape = 'u32[]', space=smem, size = 0x4, offset = 0x4, fixed_abs, tag = 'smem constant byte address 0x4 - core index']
  #allocation1 [shape = 'u32[144,128]{1,0:T(1,128)}', space=vmem, size = 0x12000, scoped, tag = 'internal scratch']
  %s0 = inlined_call_operand.vmem [shape: f32[2,64,16], index: 0, kind: input, shape index: {}]
  %s1 = inlined_call_operand.vmem [shape: f32[128,64], index: 1, kind: input, shape index: {}]
  %s2 = inlined_call_operand.vmem [shape: f32[1,128], index: 2, kind: input, shape index: {}]
  %s3 = inlined_call_operand.hbm [shape: f32[16,2,128], index: 3, kind: output, shape index: {}]
  %s4 = sld [smem:[#allocation0]]
  $region22: #{tpu_custom_call.1} parent=0
    _
  %s6 = ssub.s32 1, %s4
  %s7 = scalar_select 0, %s6, %s4
  $region1: #{tpu_custom_call.1} parent=0
    #allocation2 [shape = 'u8[16384]{0}', space=vmem, size = 0x4000, scoped, tag = 'output window, operand 0, single buffered']
    #allocation3 [shape = 's32[1]{0}', space=sflag, size = 0x4, scoped, tag = 'scoped memory for tpu_custom_call.1']
    %8 = vsyncpa [#allocation3], 0
    // Predicated region
    $region2: #{tpu_custom_call.1} parent=1 // pred_check
      _
    $region3: #{tpu_custom_call.1} parent=1 // pred_check_branch
      %10 = sbr.rel (0) target = $region5
    $region4: #{tpu_custom_call.1} parent=1 // pred_region
      _
    $region5: #{tpu_custom_call.1} parent=1 // pred_fallthru
      _
    // Predicated region
    $region6: #{tpu_custom_call.1} parent=1 // pred_check
      _
    $region7: #{tpu_custom_call.1} parent=1 // pred_check_branch
      %12 = sbr.rel (0) target = $region9
    $region8: #{tpu_custom_call.1} parent=1 // pred_region
      _
    $region9: #{tpu_custom_call.1} parent=1 // pred_fallthru
      _
    // Predicated region
    $region10: #{tpu_custom_call.1} parent=1 // pred_check
      _
    $region11: #{tpu_custom_call.1} parent=1 // pred_check_branch
      %14 = sbr.rel (0) target = $region13
    $region12: #{tpu_custom_call.1} parent=1 // pred_region
      _
    $region13: #{tpu_custom_call.1} parent=1 // pred_fallthru
      _
    %v15 = vld [vmem:[%s1] sm:$0xff]
    %v16 = vld [vmem:[%s1 + $0x8] sm:$0xff]
    %v17 = vld [vmem:[%s1 + $0x10] sm:$0xff]
    %v18 = vld [vmem:[%s1 + $0x18] sm:$0xff]
    %v19 = vld [vmem:[%s1 + $0x20] sm:$0xff]
    %v20 = vld [vmem:[%s1 + $0x28] sm:$0xff]
    %v21 = vld [vmem:[%s1 + $0x30] sm:$0xff]
    %v22 = vld [vmem:[%s1 + $0x38] sm:$0xff]
    %v23 = vld [vmem:[%s1 + $0x40] sm:$0xff]
    %v24 = vld [vmem:[%s1 + $0x48] sm:$0xff]
    %v25 = vld [vmem:[%s1 + $0x50] sm:$0xff]
    %v26 = vld [vmem:[%s1 + $0x58] sm:$0xff]
    %v27 = vld [vmem:[%s1 + $0x60] sm:$0xff]
    %v28 = vld [vmem:[%s1 + $0x68] sm:$0xff]
    %v29 = vld [vmem:[%s1 + $0x70] sm:$0xff]
    %v30 = vld [vmem:[%s1 + $0x78] sm:$0xff]
    %v31 = vld [vmem:[%s2] sm:$0x1]
    %v32 = vld [vmem:[%s0] sm:$0xff]
    %v33 = vld [vmem:[%s0 + $0x8] sm:$0xff]
    %v34 = vld [vmem:[%s0 + $0x10] sm:$0xff]
    %v35 = vld [vmem:[%s0 + $0x18] sm:$0xff]
    %v36 = vld [vmem:[%s0 + $0x20] sm:$0xff]
    %v37 = vld [vmem:[%s0 + $0x28] sm:$0xff]
    %v38 = vld [vmem:[%s0 + $0x30] sm:$0xff]
    %v39 = vld [vmem:[%s0 + $0x38] sm:$0xff]
    %vm40 = vcmask 523264
    %v42 = vsel %vm40, %v15, 0
    %v45 = vsel %vm40, %v16, 0
    %v48 = vsel %vm40, %v17, 0
    %v51 = vsel %vm40, %v18, 0
    %v54 = vsel %vm40, %v19, 0
    %v57 = vsel %vm40, %v20, 0
    %v60 = vsel %vm40, %v21, 0
    %v63 = vsel %vm40, %v22, 0
    %v66 = vsel %vm40, %v23, 0
    %v69 = vsel %vm40, %v24, 0
    %v72 = vsel %vm40, %v25, 0
    %v75 = vsel %vm40, %v26, 0
    %v78 = vsel %vm40, %v27, 0
    %v81 = vsel %vm40, %v28, 0
    %v84 = vsel %vm40, %v29, 0
    %v87 = vsel %vm40, %v30, 0
    %89 = vmatprep.subr.mxu0 0.0
    %90 = vmatpush1.msra.mxu0 %v32
    %91 = vmatprep.subr.mxu0 0.0
    %92 = vmatpush1.msra.mxu0 %v33
    %93 = vmatprep.subr.mxu0 0.0
    %94 = vmatpush1.msra.mxu0 %v34
    %95 = vmatprep.subr.mxu0 0.0
    %96 = vmatpush1.msra.mxu0 %v35
    %97 = vmatprep.subr.mxu0 0.0
    %98 = vmatpush1.msra.mxu0 %v36
    %99 = vmatprep.subr.mxu0 0.0
    %100 = vmatpush1.msra.mxu0 %v37
    %101 = vmatprep.subr.mxu0 0.0
    %102 = vmatpush1.msra.mxu0 %v38
    %103 = vmatprep.subr.mxu0 0.0
    %104 = vmatpush1.msra.mxu0 %v39
    %105 = vmatprep.subr.mxu0 0.0
    %106 = vmatpush1.msra.mxu0 0.0
    %107 = vmatprep.subr.mxu0 0.0
    %108 = vmatpush1.msra.mxu0 0.0
    %109 = vmatprep.subr.mxu0 0.0
    %110 = vmatpush1.msra.mxu0 0.0
    %111 = vmatprep.subr.mxu0 0.0
    %112 = vmatpush1.msra.mxu0 0.0
    %113 = vmatprep.subr.mxu0 0.0
    %114 = vmatpush1.msra.mxu0 0.0
    %115 = vmatprep.subr.mxu0 0.0
    %116 = vmatpush1.msra.mxu0 0.0
    %117 = vmatprep.subr.mxu0 0.0
    %118 = vmatpush1.msra.mxu0 0.0
    %119 = vmatprep.subr.mxu0 0.0
    %120 = vmatpush1.msra.mxu0 0.0
    %121 = vmatprep.subr.mxu0 0.0
    %122 = vmatpush1.msra.mxu0 0.0
    %123 = vmatprep.subr.mxu0 0.0
    %124 = vmatpush1.msra.mxu0 0.0
    %125 = vmatprep.subr.mxu0 0.0
    %126 = vmatpush1.msra.mxu0 0.0
    %127 = vmatprep.subr.mxu0 0.0
    %128 = vmatpush1.msra.mxu0 0.0
    %129 = vmatprep.subr.mxu0 0.0
    %130 = vmatpush1.msra.mxu0 0.0
    %131 = vmatprep.subr.mxu0 0.0
    %132 = vmatpush1.msra.mxu0 0.0
    %133 = vmatprep.subr.mxu0 0.0
    %134 = vmatpush1.msra.mxu0 0.0
    %135 = vmatprep.subr.mxu0 0.0
    %136 = vmatpush1.msra.mxu0 0.0
    %137 = vmatprep.subr.mxu0 0.0
    %138 = vmatpush1.msra.mxu0 0.0
    %139 = vmatprep.subr.mxu0 0.0
    %140 = vmatpush1.msra.mxu0 0.0
    %141 = vmatprep.subr.mxu0 0.0
    %142 = vmatpush1.msra.mxu0 0.0
    %143 = vmatprep.subr.mxu0 0.0
    %144 = vmatpush1.msra.mxu0 0.0
    %145 = vmatprep.subr.mxu0 0.0
    %146 = vmatpush1.msra.mxu0 0.0
    %147 = vmatprep.subr.mxu0 0.0
    %148 = vmatpush1.msra.mxu0 0.0
    %149 = vmatprep.subr.mxu0 0.0
    %150 = vmatpush1.msra.mxu0 0.0
    %151 = vmatprep.subr.mxu0 0.0
    %152 = vmatpush1.msra.mxu0 0.0
    %153 = vmatprep.mubr.f32.mxu0 0.0
    %154 = vmatmul.mubr.f32.gmra.mrb[0].mxu0 %v42
    %v155 = vpop.f32.mrb[0].mxu0
    %v156 = vadd.f32 0.0, %v155
    %v157 = vpop.f32.mrb[0].mxu0
    %158 = vmatprep.mubr.f32.mxu0 0.0
    %159 = vmatmul.mubr.f32.gmra.mrb[0].mxu0 %v45
    %v160 = vpop.f32.mrb[0].mxu0
    %v161 = vadd.f32 0.0, %v160
    %v162 = vpop.f32.mrb[0].mxu0
    %163 = vmatprep.mubr.f32.mxu0 0.0
    %164 = vmatmul.mubr.f32.gmra.mrb[0].mxu0 %v48
    %v165 = vpop.f32.mrb[0].mxu0
    %v166 = vadd.f32 0.0, %v165
    %v167 = vpop.f32.mrb[0].mxu0
    %168 = vmatprep.mubr.f32.mxu0 0.0
    %169 = vmatmul.mubr.f32.gmra.mrb[0].mxu0 %v51
    %v170 = vpop.f32.mrb[0].mxu0
    %v171 = vadd.f32 0.0, %v170
    %v172 = vpop.f32.mrb[0].mxu0
    %173 = vmatprep.mubr.f32.mxu0 0.0
    %174 = vmatmul.mubr.f32.gmra.mrb[0].mxu0 %v54
    %v175 = vpop.f32.mrb[0].mxu0
    %v176 = vadd.f32 0.0, %v175
    %v177 = vpop.f32.mrb[0].mxu0
    %178 = vmatprep.mubr.f32.mxu0 0.0
    %179 = vmatmul.mubr.f32.gmra.mrb[0].mxu0 %v57
    %v180 = vpop.f32.mrb[0].mxu0
    %v181 = vadd.f32 0.0, %v180
    %v182 = vpop.f32.mrb[0].mxu0
    %183 = vmatprep.mubr.f32.mxu0 0.0
    %184 = vmatmul.mubr.f32.gmra.mrb[0].mxu0 %v60
    %v185 = vpop.f32.mrb[0].mxu0
    %v186 = vadd.f32 0.0, %v185
    %v187 = vpop.f32.mrb[0].mxu0
    %188 = vmatprep.mubr.f32.mxu0 0.0
    %189 = vmatmul.mubr.f32.gmra.mrb[0].mxu0 %v63
    %v190 = vpop.f32.mrb[0].mxu0
    %v191 = vadd.f32 0.0, %v190
    %v192 = vpop.f32.mrb[0].mxu0
    %193 = vmatprep.mubr.f32.mxu0 0.0
    %194 = vmatmul.mubr.f32.gmra.mrb[0].mxu0 %v66
    %v195 = vpop.f32.mrb[0].mxu0
    %v196 = vadd.f32 0.0, %v195
    %v197 = vpop.f32.mrb[0].mxu0
    %198 = vmatprep.mubr.f32.mxu0 0.0
    %199 = vmatmul.mubr.f32.gmra.mrb[0].mxu0 %v69
    %v200 = vpop.f32.mrb[0].mxu0
    %v201 = vadd.f32 0.0, %v200
    %v202 = vpop.f32.mrb[0].mxu0
    %203 = vmatprep.mubr.f32.mxu0 0.0
    %204 = vmatmul.mubr.f32.gmra.mrb[0].mxu0 %v72
    %v205 = vpop.f32.mrb[0].mxu0
    %v206 = vadd.f32 0.0, %v205
    %v207 = vpop.f32.mrb[0].mxu0
    %208 = vmatprep.mubr.f32.mxu0 0.0
    %209 = vmatmul.mubr.f32.gmra.mrb[0].mxu0 %v75
    %v210 = vpop.f32.mrb[0].mxu0
    %v211 = vadd.f32 0.0, %v210
    %v212 = vpop.f32.mrb[0].mxu0
    %213 = vmatprep.mubr.f32.mxu0 0.0
    %214 = vmatmul.mubr.f32.gmra.mrb[0].mxu0 %v78
    %v215 = vpop.f32.mrb[0].mxu0
    %v216 = vadd.f32 0.0, %v215
    %v217 = vpop.f32.mrb[0].mxu0
    %218 = vmatprep.mubr.f32.mxu0 0.0
    %219 = vmatmul.mubr.f32.gmra.mrb[0].mxu0 %v81
    %v220 = vpop.f32.mrb[0].mxu0
    %v221 = vadd.f32 0.0, %v220
    %v222 = vpop.f32.mrb[0].mxu0
    %223 = vmatprep.mubr.f32.mxu0 0.0
    %224 = vmatmul.mubr.f32.gmra.mrb[0].mxu0 %v84
    %v225 = vpop.f32.mrb[0].mxu0
    %v226 = vadd.f32 0.0, %v225
    %v227 = vpop.f32.mrb[0].mxu0
    %228 = vmatprep.mubr.f32.mxu0 0.0
    %229 = vmatmul.mubr.f32.gmra.mrb[0].mxu0 %v87
    %v230 = vpop.f32.mrb[0].mxu0
    %v231 = vadd.f32 0.0, %v230
    %v232 = vpop.f32.mrb[0].mxu0
    %233 = vdwg.mxu0
    %234 = vxpose.xlu0.b32.start [1/16] %v156, 128
    %235 = vxpose.xlu0.b32.cont [2/16] %v161, 128
    %236 = vxpose.xlu0.b32.cont [3/16] %v166, 128
    %237 = vxpose.xlu0.b32.cont [4/16] %v171, 128
    %238 = vxpose.xlu0.b32.cont [5/16] %v176, 128
    %239 = vxpose.xlu0.b32.cont [6/16] %v181, 128
    %240 = vxpose.xlu0.b32.cont [7/16] %v186, 128
    %241 = vxpose.xlu0.b32.cont [8/16] %v191, 128
    %242 = vxpose.xlu0.b32.cont [9/16] %v196, 128
    %243 = vxpose.xlu0.b32.cont [10/16] %v201, 128
    %244 = vxpose.xlu0.b32.cont [11/16] %v206, 128
    %245 = vxpose.xlu0.b32.cont [12/16] %v211, 128
    %246 = vxpose.xlu0.b32.cont [13/16] %v216, 128
    %247 = vxpose.xlu0.b32.cont [14/16] %v221, 128
    %248 = vxpose.xlu0.b32.cont [15/16] %v226, 128
    %249 = vxpose.xlu0.b32.end [16/16] %v231, 128
    %v250 = vpop.trf.xlu0
    %v251 = vpop.trf.xlu0
    %v252 = vpop.trf.xlu0
    %v253 = vpop.trf.xlu0
    %v254 = vpop.trf.xlu0
    %v255 = vpop.trf.xlu0
    %v256 = vpop.trf.xlu0
    %v257 = vpop.trf.xlu0
    %v258 = vpop.trf.xlu0
    %v259 = vpop.trf.xlu0
    %v260 = vpop.trf.xlu0
    %v261 = vpop.trf.xlu0
    %v262 = vpop.trf.xlu0
    %v263 = vpop.trf.xlu0
    %v264 = vpop.trf.xlu0
    %v265 = vpop.trf.xlu0
    %v267 = vlaneseq
    %v268 = vshrl.u32 %v267, 7
    %v269 = vsub.s32 0, %v268
    %v270 = vrot.slane %v31, %v269
    %v272 = vadd.f32 %v250, %v270
    %v273 = vadd.f32 %v251, %v270
    %v276 = vcombine.high %v272, %v272
    %v278 = vunpack.c.l.s4 1966171168
    %v279 = vunpack.c.0.s8 %v278
    %v280 = vlaneseq
    %v281 = vshrl.u32 %v280, 7
    %v282 = vsub.s32 %v279, %v281
    %v283 = vrot.slane %v272, %v282
    %v285 = vunpack.c.l.s4 1966171168
    %v286 = vunpack.c.0.s8 %v285
    %v287 = vlaneseq
    %v288 = vshrl.u32 %v287, 7
    %v289 = vsub.s32 %v286, %v288
    %v290 = vrot.slane %v276, %v289
    %v291 = vcombine.high %v283, %v283
    %v292 = vcombine.high %v290, %v290
    %v294 = vunpack.c.l.s4 1966171168
    %v295 = vunpack.c.0.s8 %v294
    %v296 = vlaneseq
    %v297 = vshrl.u32 %v296, 7
    %v298 = vsub.s32 %v295, %v297
    %v299 = vrot.slane %v283, %v298
    %v301 = vunpack.c.l.s4 1966171168
    %v302 = vunpack.c.0.s8 %v301
    %v303 = vlaneseq
    %v304 = vshrl.u32 %v303, 7
    %v305 = vsub.s32 %v302, %v304
    %v306 = vrot.slane %v290, %v305
    %v308 = vunpack.c.l.s4 1966171168
    %v309 = vunpack.c.0.s8 %v308
    %v310 = vlaneseq
    %v311 = vshrl.u32 %v310, 7
    %v312 = vsub.s32 %v309, %v311
    %v313 = vrot.slane %v291, %v312
    %v315 = vunpack.c.l.s4 1966171168
    %v316 = vunpack.c.0.s8 %v315
    %v317 = vlaneseq
    %v318 = vshrl.u32 %v317, 7
    %v319 = vsub.s32 %v316, %v318
    %v320 = vrot.slane %v292, %v319
    %v321 = vcombine.high %v299, %v299
    %v322 = vcombine.high %v306, %v306
    %v323 = vcombine.high %v313, %v313
    %v324 = vcombine.high %v320, %v320
    %v325 = vcombine.high %v273, %v273
    %v327 = vunpack.c.l.s4 1966171168
    %v328 = vunpack.c.0.s8 %v327
    %v329 = vlaneseq
    %v330 = vshrl.u32 %v329, 7
    %v331 = vsub.s32 %v328, %v330
    %v332 = vrot.slane %v273, %v331
    %v334 = vunpack.c.l.s4 1966171168
    %v335 = vunpack.c.0.s8 %v334
    %v336 = vlaneseq
    %v337 = vshrl.u32 %v336, 7
    %v338 = vsub.s32 %v335, %v337
    %v339 = vrot.slane %v325, %v338
    %v340 = vcombine.high %v332, %v332
    %v341 = vcombine.high %v339, %v339
    %v343 = vunpack.c.l.s4 1966171168
    %v344 = vunpack.c.0.s8 %v343
    %v345 = vlaneseq
    %v346 = vshrl.u32 %v345, 7
    %v347 = vsub.s32 %v344, %v346
    %v348 = vrot.slane %v332, %v347
    %v350 = vunpack.c.l.s4 1966171168
    %v351 = vunpack.c.0.s8 %v350
    %v352 = vlaneseq
    %v353 = vshrl.u32 %v352, 7
    %v354 = vsub.s32 %v351, %v353
    %v355 = vrot.slane %v339, %v354
    %v357 = vunpack.c.l.s4 1966171168
    %v358 = vunpack.c.0.s8 %v357
    %v359 = vlaneseq
    %v360 = vshrl.u32 %v359, 7
    %v361 = vsub.s32 %v358, %v360
    %v362 = vrot.slane %v340, %v361
    %v364 = vunpack.c.l.s4 1966171168
    %v365 = vunpack.c.0.s8 %v364
    %v366 = vlaneseq
    %v367 = vshrl.u32 %v366, 7
    %v368 = vsub.s32 %v365, %v367
    %v369 = vrot.slane %v341, %v368
    %v370 = vcombine.high %v348, %v348
    %v371 = vcombine.high %v355, %v355
    %v372 = vcombine.high %v362, %v362
    %v373 = vcombine.high %v369, %v369
    %390 = vst [vmem:[#allocation2] sm:$0x1] %v299
    %391 = vst [vmem:[#allocation2 + $0x2] sm:$0x1] %v313
    %392 = vst [vmem:[#allocation2 + $0x4] sm:$0x1] %v321
    %393 = vst [vmem:[#allocation2 + $0x6] sm:$0x1] %v323
    %394 = vst [vmem:[#allocation2 + $0x8] sm:$0x1] %v306
    %395 = vst [vmem:[#allocation2 + $0xa] sm:$0x1] %v320
    %396 = vst [vmem:[#allocation2 + $0xc] sm:$0x1] %v322
    %397 = vst [vmem:[#allocation2 + $0xe] sm:$0x1] %v324
    %398 = vst [vmem:[#allocation2 + $0x10] sm:$0x1] %v348
    %399 = vst [vmem:[#allocation2 + $0x12] sm:$0x1] %v362
    %400 = vst [vmem:[#allocation2 + $0x14] sm:$0x1] %v370
    %401 = vst [vmem:[#allocation2 + $0x16] sm:$0x1] %v372
    %402 = vst [vmem:[#allocation2 + $0x18] sm:$0x1] %v355
    %403 = vst [vmem:[#allocation2 + $0x1a] sm:$0x1] %v369
    %404 = vst [vmem:[#allocation2 + $0x1c] sm:$0x1] %v371
    %405 = vst [vmem:[#allocation2 + $0x1e] sm:$0x1] %v373
    %s406 = scalar_lea.vmem %s0, 64
    %v407 = vld [vmem:[%s406] sm:$0xff]
    %v408 = vld [vmem:[%s406 + $0x8] sm:$0xff]
    %v409 = vld [vmem:[%s406 + $0x10] sm:$0xff]
    %v410 = vld [vmem:[%s406 + $0x18] sm:$0xff]
    %v411 = vld [vmem:[%s406 + $0x20] sm:$0xff]
    %v412 = vld [vmem:[%s406 + $0x28] sm:$0xff]
    %v413 = vld [vmem:[%s406 + $0x30] sm:$0xff]
    %v414 = vld [vmem:[%s406 + $0x38] sm:$0xff]
    %415 = vmatprep.subr.mxu0 0.0
    %416 = vmatpush1.msra.mxu0 %v407
    %417 = vmatprep.subr.mxu0 0.0
    %418 = vmatpush1.msra.mxu0 %v408
    %419 = vmatprep.subr.mxu0 0.0
    %420 = vmatpush1.msra.mxu0 %v409
    %421 = vmatprep.subr.mxu0 0.0
    %422 = vmatpush1.msra.mxu0 %v410
    %423 = vmatprep.subr.mxu0 0.0
    %424 = vmatpush1.msra.mxu0 %v411
    %425 = vmatprep.subr.mxu0 0.0
    %426 = vmatpush1.msra.mxu0 %v412
    %427 = vmatprep.subr.mxu0 0.0
    %428 = vmatpush1.msra.mxu0 %v413
    %429 = vmatprep.subr.mxu0 0.0
    %430 = vmatpush1.msra.mxu0 %v414
    %431 = vmatprep.subr.mxu0 0.0
    %432 = vmatpush1.msra.mxu0 0.0
    %433 = vmatprep.subr.mxu0 0.0
    %434 = vmatpush1.msra.mxu0 0.0
    %435 = vmatprep.subr.mxu0 0.0
    %436 = vmatpush1.msra.mxu0 0.0
    %437 = vmatprep.subr.mxu0 0.0
    %438 = vmatpush1.msra.mxu0 0.0
    %439 = vmatprep.subr.mxu0 0.0
    %440 = vmatpush1.msra.mxu0 0.0
    %441 = vmatprep.subr.mxu0 0.0
    %442 = vmatpush1.msra.mxu0 0.0
    %443 = vmatprep.subr.mxu0 0.0
    %444 = vmatpush1.msra.mxu0 0.0
    %445 = vmatprep.subr.mxu0 0.0
    %446 = vmatpush1.msra.mxu0 0.0
    %447 = vmatprep.subr.mxu0 0.0
    %448 = vmatpush1.msra.mxu0 0.0
    %449 = vmatprep.subr.mxu0 0.0
    %450 = vmatpush1.msra.mxu0 0.0
    %451 = vmatprep.subr.mxu0 0.0
    %452 = vmatpush1.msra.mxu0 0.0
    %453 = vmatprep.subr.mxu0 0.0
    %454 = vmatpush1.msra.mxu0 0.0
    %455 = vmatprep.subr.mxu0 0.0
    %456 = vmatpush1.msra.mxu0 0.0
    %457 = vmatprep.subr.mxu0 0.0
    %458 = vmatpush1.msra.mxu0 0.0
    %459 = vmatprep.subr.mxu0 0.0
    %460 = vmatpush1.msra.mxu0 0.0
    %461 = vmatprep.subr.mxu0 0.0
    %462 = vmatpush1.msra.mxu0 0.0
    %463 = vmatprep.subr.mxu0 0.0
    %464 = vmatpush1.msra.mxu0 0.0
    %465 = vmatprep.subr.mxu0 0.0
    %466 = vmatpush1.msra.mxu0 0.0
    %467 = vmatprep.subr.mxu0 0.0
    %468 = vmatpush1.msra.mxu0 0.0
    %469 = vmatprep.subr.mxu0 0.0
    %470 = vmatpush1.msra.mxu0 0.0
    %471 = vmatprep.subr.mxu0 0.0
    %472 = vmatpush1.msra.mxu0 0.0
    %473 = vmatprep.subr.mxu0 0.0
    %474 = vmatpush1.msra.mxu0 0.0
    %475 = vmatprep.subr.mxu0 0.0
    %476 = vmatpush1.msra.mxu0 0.0
    %477 = vmatprep.subr.mxu0 0.0
    %478 = vmatpush1.msra.mxu0 0.0
    %479 = vmatprep.mubr.f32.mxu0 0.0
    %480 = vmatmul.mubr.f32.gmra.mrb[0].mxu0 %v42
    %v481 = vpop.f32.mrb[0].mxu0
    %v482 = vadd.f32 0.0, %v481
    %v483 = vpop.f32.mrb[0].mxu0
    %484 = vmatprep.mubr.f32.mxu0 0.0
    %485 = vmatmul.mubr.f32.gmra.mrb[0].mxu0 %v45
    %v486 = vpop.f32.mrb[0].mxu0
    %v487 = vadd.f32 0.0, %v486
    %v488 = vpop.f32.mrb[0].mxu0
    %489 = vmatprep.mubr.f32.mxu0 0.0
    %490 = vmatmul.mubr.f32.gmra.mrb[0].mxu0 %v48
    %v491 = vpop.f32.mrb[0].mxu0
    %v492 = vadd.f32 0.0, %v491
    %v493 = vpop.f32.mrb[0].mxu0
    %494 = vmatprep.mubr.f32.mxu0 0.0
    %495 = vmatmul.mubr.f32.gmra.mrb[0].mxu0 %v51
    %v496 = vpop.f32.mrb[0].mxu0
    %v497 = vadd.f32 0.0, %v496
    %v498 = vpop.f32.mrb[0].mxu0
    %499 = vmatprep.mubr.f32.mxu0 0.0
    %500 = vmatmul.mubr.f32.gmra.mrb[0].mxu0 %v54
    %v501 = vpop.f32.mrb[0].mxu0
    %v502 = vadd.f32 0.0, %v501
    %v503 = vpop.f32.mrb[0].mxu0
    %504 = vmatprep.mubr.f32.mxu0 0.0
    %505 = vmatmul.mubr.f32.gmra.mrb[0].mxu0 %v57
    %v506 = vpop.f32.mrb[0].mxu0
    %v507 = vadd.f32 0.0, %v506
    %v508 = vpop.f32.mrb[0].mxu0
    %509 = vmatprep.mubr.f32.mxu0 0.0
    %510 = vmatmul.mubr.f32.gmra.mrb[0].mxu0 %v60
    %v511 = vpop.f32.mrb[0].mxu0
    %v512 = vadd.f32 0.0, %v511
    %v513 = vpop.f32.mrb[0].mxu0
    %514 = vmatprep.mubr.f32.mxu0 0.0
    %515 = vmatmul.mubr.f32.gmra.mrb[0].mxu0 %v63
    %v516 = vpop.f32.mrb[0].mxu0
    %v517 = vadd.f32 0.0, %v516
    %v518 = vpop.f32.mrb[0].mxu0
    %519 = vmatprep.mubr.f32.mxu0 0.0
    %520 = vmatmul.mubr.f32.gmra.mrb[0].mxu0 %v66
    %v521 = vpop.f32.mrb[0].mxu0
    %v522 = vadd.f32 0.0, %v521
    %v523 = vpop.f32.mrb[0].mxu0
    %524 = vmatprep.mubr.f32.mxu0 0.0
    %525 = vmatmul.mubr.f32.gmra.mrb[0].mxu0 %v69
    %v526 = vpop.f32.mrb[0].mxu0
    %v527 = vadd.f32 0.0, %v526
    %v528 = vpop.f32.mrb[0].mxu0
    %529 = vmatprep.mubr.f32.mxu0 0.0
    %530 = vmatmul.mubr.f32.gmra.mrb[0].mxu0 %v72
    %v531 = vpop.f32.mrb[0].mxu0
    %v532 = vadd.f32 0.0, %v531
    %v533 = vpop.f32.mrb[0].mxu0
    %534 = vmatprep.mubr.f32.mxu0 0.0
    %535 = vmatmul.mubr.f32.gmra.mrb[0].mxu0 %v75
    %v536 = vpop.f32.mrb[0].mxu0
    %v537 = vadd.f32 0.0, %v536
    %v538 = vpop.f32.mrb[0].mxu0
    %539 = vmatprep.mubr.f32.mxu0 0.0
    %540 = vmatmul.mubr.f32.gmra.mrb[0].mxu0 %v78
    %v541 = vpop.f32.mrb[0].mxu0
    %v542 = vadd.f32 0.0, %v541
    %v543 = vpop.f32.mrb[0].mxu0
    %544 = vmatprep.mubr.f32.mxu0 0.0
    %545 = vmatmul.mubr.f32.gmra.mrb[0].mxu0 %v81
    %v546 = vpop.f32.mrb[0].mxu0
    %v547 = vadd.f32 0.0, %v546
    %v548 = vpop.f32.mrb[0].mxu0
    %549 = vmatprep.mubr.f32.mxu0 0.0
    %550 = vmatmul.mubr.f32.gmra.mrb[0].mxu0 %v84
    %v551 = vpop.f32.mrb[0].mxu0
    %v552 = vadd.f32 0.0, %v551
    %v553 = vpop.f32.mrb[0].mxu0
    %554 = vmatprep.mubr.f32.mxu0 0.0
    %555 = vmatmul.mubr.f32.gmra.mrb[0].mxu0 %v87
    %v556 = vpop.f32.mrb[0].mxu0
    %v557 = vadd.f32 0.0, %v556
    %v558 = vpop.f32.mrb[0].mxu0
    %559 = vdwg.mxu0
    %560 = vxpose.xlu0.b32.start [1/16] %v482, 128
    %561 = vxpose.xlu0.b32.cont [2/16] %v487, 128
    %562 = vxpose.xlu0.b32.cont [3/16] %v492, 128
    %563 = vxpose.xlu0.b32.cont [4/16] %v497, 128
    %564 = vxpose.xlu0.b32.cont [5/16] %v502, 128
    %565 = vxpose.xlu0.b32.cont [6/16] %v507, 128
    %566 = vxpose.xlu0.b32.cont [7/16] %v512, 128
    %567 = vxpose.xlu0.b32.cont [8/16] %v517, 128
    %568 = vxpose.xlu0.b32.cont [9/16] %v522, 128
    %569 = vxpose.xlu0.b32.cont [10/16] %v527, 128
    %570 = vxpose.xlu0.b32.cont [11/16] %v532, 128
    %571 = vxpose.xlu0.b32.cont [12/16] %v537, 128
    %572 = vxpose.xlu0.b32.cont [13/16] %v542, 128
    %573 = vxpose.xlu0.b32.cont [14/16] %v547, 128
    %574 = vxpose.xlu0.b32.cont [15/16] %v552, 128
    %575 = vxpose.xlu0.b32.end [16/16] %v557, 128
    %v576 = vpop.trf.xlu0
    %v577 = vpop.trf.xlu0
    %v578 = vpop.trf.xlu0
    %v579 = vpop.trf.xlu0
    %v580 = vpop.trf.xlu0
    %v581 = vpop.trf.xlu0
    %v582 = vpop.trf.xlu0
    %v583 = vpop.trf.xlu0
    %v584 = vpop.trf.xlu0
    %v585 = vpop.trf.xlu0
    %v586 = vpop.trf.xlu0
    %v587 = vpop.trf.xlu0
    %v588 = vpop.trf.xlu0
    %v589 = vpop.trf.xlu0
    %v590 = vpop.trf.xlu0
    %v591 = vpop.trf.xlu0
    %v592 = vadd.f32 %v576, %v270
    %v593 = vadd.f32 %v577, %v270
    %v596 = vcombine.high %v592, %v592
    %v598 = vunpack.c.l.s4 1966171168
    %v599 = vunpack.c.0.s8 %v598
    %v600 = vlaneseq
    %v601 = vshrl.u32 %v600, 7
    %v602 = vsub.s32 %v599, %v601
    %v603 = vrot.slane %v592, %v602
    %v605 = vunpack.c.l.s4 1966171168
    %v606 = vunpack.c.0.s8 %v605
    %v607 = vlaneseq
    %v608 = vshrl.u32 %v607, 7
    %v609 = vsub.s32 %v606, %v608
    %v610 = vrot.slane %v596, %v609
    %v611 = vcombine.high %v603, %v603
    %v612 = vcombine.high %v610, %v610
    %v614 = vunpack.c.l.s4 1966171168
    %v615 = vunpack.c.0.s8 %v614
    %v616 = vlaneseq
    %v617 = vshrl.u32 %v616, 7
    %v618 = vsub.s32 %v615, %v617
    %v619 = vrot.slane %v603, %v618
    %v621 = vunpack.c.l.s4 1966171168
    %v622 = vunpack.c.0.s8 %v621
    %v623 = vlaneseq
    %v624 = vshrl.u32 %v623, 7
    %v625 = vsub.s32 %v622, %v624
    %v626 = vrot.slane %v610, %v625
    %v628 = vunpack.c.l.s4 1966171168
    %v629 = vunpack.c.0.s8 %v628
    %v630 = vlaneseq
    %v631 = vshrl.u32 %v630, 7
    %v632 = vsub.s32 %v629, %v631
    %v633 = vrot.slane %v611, %v632
    %v635 = vunpack.c.l.s4 1966171168
    %v636 = vunpack.c.0.s8 %v635
    %v637 = vlaneseq
    %v638 = vshrl.u32 %v637, 7
    %v639 = vsub.s32 %v636, %v638
    %v640 = vrot.slane %v612, %v639
    %v641 = vcombine.high %v619, %v619
    %v642 = vcombine.high %v626, %v626
    %v643 = vcombine.high %v633, %v633
    %v644 = vcombine.high %v640, %v640
    %v645 = vcombine.high %v593, %v593
    %v647 = vunpack.c.l.s4 1966171168
    %v648 = vunpack.c.0.s8 %v647
    %v649 = vlaneseq
    %v650 = vshrl.u32 %v649, 7
    %v651 = vsub.s32 %v648, %v650
    %v652 = vrot.slane %v593, %v651
    %v654 = vunpack.c.l.s4 1966171168
    %v655 = vunpack.c.0.s8 %v654
    %v656 = vlaneseq
    %v657 = vshrl.u32 %v656, 7
    %v658 = vsub.s32 %v655, %v657
    %v659 = vrot.slane %v645, %v658
    %v660 = vcombine.high %v652, %v652
    %v661 = vcombine.high %v659, %v659
    %v663 = vunpack.c.l.s4 1966171168
    %v664 = vunpack.c.0.s8 %v663
    %v665 = vlaneseq
    %v666 = vshrl.u32 %v665, 7
    %v667 = vsub.s32 %v664, %v666
    %v668 = vrot.slane %v652, %v667
    %v670 = vunpack.c.l.s4 1966171168
    %v671 = vunpack.c.0.s8 %v670
    %v672 = vlaneseq
    %v673 = vshrl.u32 %v672, 7
    %v674 = vsub.s32 %v671, %v673
    %v675 = vrot.slane %v659, %v674
    %v677 = vunpack.c.l.s4 1966171168
    %v678 = vunpack.c.0.s8 %v677
    %v679 = vlaneseq
    %v680 = vshrl.u32 %v679, 7
    %v681 = vsub.s32 %v678, %v680
    %v682 = vrot.slane %v660, %v681
    %v684 = vunpack.c.l.s4 1966171168
    %v685 = vunpack.c.0.s8 %v684
    %v686 = vlaneseq
    %v687 = vshrl.u32 %v686, 7
    %v688 = vsub.s32 %v685, %v687
    %v689 = vrot.slane %v661, %v688
    %v690 = vcombine.high %v668, %v668
    %v691 = vcombine.high %v675, %v675
    %v692 = vcombine.high %v682, %v682
    %v693 = vcombine.high %v689, %v689
    %710 = vst [vmem:[#allocation2 + $0x1] sm:$0x1] %v619
    %711 = vst [vmem:[#allocation2 + $0x3] sm:$0x1] %v633
    %712 = vst [vmem:[#allocation2 + $0x5] sm:$0x1] %v641
    %713 = vst [vmem:[#allocation2 + $0x7] sm:$0x1] %v643
    %714 = vst [vmem:[#allocation2 + $0x9] sm:$0x1] %v626
    %715 = vst [vmem:[#allocation2 + $0xb] sm:$0x1] %v640
    %716 = vst [vmem:[#allocation2 + $0xd] sm:$0x1] %v642
    %717 = vst [vmem:[#allocation2 + $0xf] sm:$0x1] %v644
    %718 = vst [vmem:[#allocation2 + $0x11] sm:$0x1] %v668
    %719 = vst [vmem:[#allocation2 + $0x13] sm:$0x1] %v682
    %720 = vst [vmem:[#allocation2 + $0x15] sm:$0x1] %v690
    %721 = vst [vmem:[#allocation2 + $0x17] sm:$0x1] %v692
    %722 = vst [vmem:[#allocation2 + $0x19] sm:$0x1] %v675
    %723 = vst [vmem:[#allocation2 + $0x1b] sm:$0x1] %v689
    %724 = vst [vmem:[#allocation2 + $0x1d] sm:$0x1] %v691
    %725 = vst [vmem:[#allocation2 + $0x1f] sm:$0x1] %v693
    // Predicated region
    $region14: #{tpu_custom_call.1} parent=1 // pred_check
      _
    $region15: #{tpu_custom_call.1} parent=1 // pred_check_branch
      %727 = sbr.rel (0) target = $region17
    $region16: #{tpu_custom_call.1} parent=1 // pred_region
      %s729 = ssub.s32 512, 512
      %730 = vsyncadd [#allocation3], %s729
      %s731 = sshll.u32 [#allocation2], 4
      %s732 = int_to_ptr.vmem [resolvable:$true] %s731
      %737 = dma.vmem_to_hbm [thread:$0]  %s732, 512, %s3, [#allocation3], 32, 32, 2
    $region17: #{tpu_custom_call.1} parent=1 // pred_fallthru
      _
    // Predicated region
    $region18: #{tpu_custom_call.1} parent=1 // pred_check
      _
    $region19: #{tpu_custom_call.1} parent=1 // pred_check_branch
      %739 = sbr.rel (0) target = $region21
    $region20: #{tpu_custom_call.1} parent=1 // pred_region
      %740 = dma.done [#allocation3], 512
    $region21: #{tpu_custom_call.1} parent=1 // pred_fallthru
      _
    %741 = vsyncpa [#allocation3], 1

</llo_original>
